<compile_context>
chip_gen: v5e
topology: v5e:2x2
jax: 0.10.0
libtpu: 0.0.40
codegen_flags: <defaults>
</compile_context>

<pallas_src>
import math

import jax
import jax.numpy as jnp
from jax import lax
from jax.experimental import pallas as pl
from jax.experimental.pallas import tpu as pltpu

_INV_SQRT2 = 0.7071067811865476


def linear_gelu_t_kernel(xt_ref, wt_ref, b_ref, ot_ref):
    # Transposed formulation: y^T = W^T @ x^T  (result (N, M), lane-dense in M)
    v1 = jnp.dot(wt_ref[...], xt_ref[...], preferred_element_type=jnp.float32)
    v1 = v1 + b_ref[...]                 # b is (N, 1): per-row bias, lane-broadcast
    # exact erf-GELU, constants folded: 0.5*v1*(erf(v1*c)+1) == h*erf(v1*c) + h
    h = v1 * 0.5
    ot_ref[...] = (h * lax.erf(v1 * _INV_SQRT2) + h).astype(ot_ref.dtype)


def linear_gelu(x, w, b):
    """x: (..., K) float32, w: (K, N), b: (N,). Returns erf-GELU(x @ w + b)."""
    orig_shape = x.shape
    K = orig_shape[-1]
    N = w.shape[1]
    M = math.prod(orig_shape[:-1])       # static Python int, no device round-trip

    # Present lane-dense operands: x^T (K, M), W^T (N, K), bias as a column.
    xt = x.reshape(M, K).T               # (K, M)
    wt = w.T                             # (N, K)
    bcol = b.reshape(N, 1)               # (N, 1)

    cost = pl.CostEstimate(
        flops=2 * M * K * N,
        transcendentals=M * N,
        bytes_accessed=4 * (M * K + K * N + N + M * N),
    )

    out_t = pl.pallas_call(
        linear_gelu_t_kernel,
        out_shape=jax.ShapeDtypeStruct((N, M), x.dtype),
        in_specs=[
            pl.BlockSpec(memory_space=pltpu.MemorySpace.VMEM),
            pl.BlockSpec(memory_space=pltpu.MemorySpace.VMEM),
            pl.BlockSpec(memory_space=pltpu.MemorySpace.VMEM),
        ],
        out_specs=pl.BlockSpec(memory_space=pltpu.MemorySpace.VMEM),
        cost_estimate=cost,
    )(xt, wt, bcol)

    # Layout plumbing back to the natural (..., N) orientation.
    return out_t.T.reshape(orig_shape[:-1] + (N,))


if __name__ == "__main__":
    key = jax.random.PRNGKey(0)
    kx, kw, kb = jax.random.split(key, 3)

    B, C, H, W = 2, 4, 16, 32            # Linear acts over the last dim (K=32)
    K = W
    N = K                                # assumed nn.Linear(K, K)

    x = jax.random.normal(kx, (B, C, H, W), dtype=jnp.float32)
    w = jax.random.normal(kw, (K, N), dtype=jnp.float32) * (1.0 / jnp.sqrt(K))
    b = jax.random.normal(kb, (N,), dtype=jnp.float32) * 0.01

    out = linear_gelu(x, w, b)
    jax.block_until_ready(out)

    # reference check (plain JAX)
    v1 = jnp.einsum("bchk,kn->bchn", x, w) + b
    ref = (v1 * 0.5) * (lax.erf(v1 * _INV_SQRT2) + 1.0)
    assert out.shape == (B, C, H, N)
    assert jnp.allclose(out, ref, atol=1e-5, rtol=1e-5)

    print("KERNEL_OK")
</pallas_src>

<mosaic_0001>
module attributes {stable_mosaic.version = 11 : i64} {
  func.func @linear_gelu_t_kernel(%arg0: memref<32x128xf32, #tpu.memory_space<vmem>>, %arg1: memref<32x32xf32, #tpu.memory_space<vmem>>, %arg2: memref<32x1xf32, #tpu.memory_space<vmem>>, %arg3: memref<32x128xf32, #tpu.memory_space<vmem>>) attributes {dimension_semantics = [], scalar_prefetch = 0 : i64, scratch_operands = 0 : i64, tpu.core_type = #tpu.core_type<tc>} {
    %c0 = arith.constant 0 : index
    %c0_0 = arith.constant 0 : index
    %0 = vector.load %arg1[%c0, %c0_0] : memref<32x32xf32, #tpu.memory_space<vmem>>, vector<32x32xf32>
    %c0_1 = arith.constant 0 : index
    %c0_2 = arith.constant 0 : index
    %1 = vector.load %arg0[%c0_1, %c0_2] : memref<32x128xf32, #tpu.memory_space<vmem>>, vector<32x128xf32>
    %cst = arith.constant dense<0.000000e+00> : vector<32x128xf32>
    %2 = tpu.matmul %0, %1, %cst {dimension_numbers = #tpu.dot_dimension_numbers<[1], [0], [0], [1], [0, 0, 1, 1], [], []>} : vector<32x32xf32>, vector<32x128xf32>, vector<32x128xf32> -> vector<32x128xf32>
    %c0_3 = arith.constant 0 : index
    %c0_4 = arith.constant 0 : index
    %3 = vector.load %arg2[%c0_3, %c0_4] : memref<32x1xf32, #tpu.memory_space<vmem>>, vector<32x1xf32>
    %4 = vector.broadcast %3 : vector<32x1xf32> to vector<32x128xf32>
    %5 = arith.addf %2, %4 : vector<32x128xf32>
    %cst_5 = arith.constant 5.000000e-01 : f32
    %6 = vector.broadcast %cst_5 : f32 to vector<32x128xf32>
    %7 = arith.mulf %5, %6 : vector<32x128xf32>
    %cst_6 = arith.constant 0.707106769 : f32
    %8 = vector.broadcast %cst_6 : f32 to vector<32x128xf32>
    %9 = arith.mulf %5, %8 : vector<32x128xf32>
    %10 = math.erf %9 : vector<32x128xf32>
    %11 = arith.mulf %7, %10 : vector<32x128xf32>
    %12 = arith.addf %11, %7 : vector<32x128xf32>
    %c0_7 = arith.constant 0 : index
    %c0_8 = arith.constant 0 : index
    %13 = vector.load %arg3[%c0_7, %c0_8] : memref<32x128xf32, #tpu.memory_space<vmem>>, vector<32x128xf32>
    tpu.vector_store %arg3[%c0_7, %c0_8], %12 {strides = array<i32>} : memref<32x128xf32, #tpu.memory_space<vmem>>, vector<32x128xf32>,
    return
  }
}

</mosaic_0001>

<llo_original>
// kernel: tpu_custom_call.1
$region0: #{tpu_custom_call.1}
  #allocation0 [shape = 'u32[]', space=smem, size = 0x4, offset = 0x4, fixed_abs, tag = 'smem constant byte address 0x4 - core index']
  #allocation1 [shape = 'u32[72,128]{1,0:T(1,128)}', space=vmem, size = 0x9000, scoped, tag = 'internal scratch']
  %s0 = inlined_call_operand.vmem [shape: f32[32,128], index: 0, kind: input, shape index: {}]
  %s1 = inlined_call_operand.hbm [shape: f32[32,32], index: 1, kind: input, shape index: {}]
  %s2 = inlined_call_operand.vmem [shape: f32[32,1], index: 2, kind: input, shape index: {}]
  %s3 = inlined_call_operand.hbm [shape: f32[32,128], index: 3, kind: output, shape index: {}]
  %s4 = sld [smem:[#allocation0]]
  $region26: #{tpu_custom_call.1} parent=0
    _
  %s6 = ssub.s32 1, %s4
  %s7 = scalar_select 0, %s6, %s4
  $region1: #{tpu_custom_call.1} parent=0
    #allocation2 [shape = 'u8[16384]{0}', space=vmem, size = 0x4000, scoped, tag = 'input window, operand 1, single buffered']
    #allocation3 [shape = 's32[1]{0}', space=sflag, size = 0x4, scoped, tag = 'scoped memory for tpu_custom_call.1']
    #allocation4 [shape = 's32[1]{0}', space=sflag, size = 0x4, scoped, tag = 'scoped memory for tpu_custom_call.1']
    #allocation5 [shape = 'u8[16384]{0}', space=vmem, size = 0x4000, scoped, tag = 'output window, operand 0, single buffered']
    %8 = vsyncpa [#allocation3], 0
    %9 = vsyncpa [#allocation4], 0
    // Predicated region
    $region2: #{tpu_custom_call.1} parent=1 // pred_check
      _
    $region3: #{tpu_custom_call.1} parent=1 // pred_check_branch
      %11 = sbr.rel (0) target = $region5
    $region4: #{tpu_custom_call.1} parent=1 // pred_region
      _
    $region5: #{tpu_custom_call.1} parent=1 // pred_fallthru
      _
    // Predicated region
    $region6: #{tpu_custom_call.1} parent=1 // pred_check
      _
    $region7: #{tpu_custom_call.1} parent=1 // pred_check_branch
      %13 = sbr.rel (0) target = $region9
    $region8: #{tpu_custom_call.1} parent=1 // pred_region
      %15 = vsyncadd [#allocation3], 0
      %s16 = sshll.u32 %s1, 4
      %s17 = int_to_ptr.hbm [resolvable:$true] %s16
      %s18 = sshll.u32 [#allocation2], 4
      %s19 = int_to_ptr.vmem [resolvable:$true] %s18
      %24 = dma.hbm_to_vmem [thread:$0]  %s17, 512, %s19, [#allocation3], 128, 128, 8
    $region9: #{tpu_custom_call.1} parent=1 // pred_fallthru
      _
    // Predicated region
    $region10: #{tpu_custom_call.1} parent=1 // pred_check
      _
    $region11: #{tpu_custom_call.1} parent=1 // pred_check_branch
      %26 = sbr.rel (0) target = $region13
    $region12: #{tpu_custom_call.1} parent=1 // pred_region
      _
    $region13: #{tpu_custom_call.1} parent=1 // pred_fallthru
      _
    // Predicated region
    $region14: #{tpu_custom_call.1} parent=1 // pred_check
      _
    $region15: #{tpu_custom_call.1} parent=1 // pred_check_branch
      %28 = sbr.rel (0) target = $region17
    $region16: #{tpu_custom_call.1} parent=1 // pred_region
      %30 = dma.done [#allocation3], 512
    $region17: #{tpu_custom_call.1} parent=1 // pred_fallthru
      _
    %v31 = vld [vmem:[#allocation2] sm:$0xff]
    %v32 = vld [vmem:[#allocation2 + $0x8] sm:$0xff]
    %v33 = vld [vmem:[#allocation2 + $0x10] sm:$0xff]
    %v34 = vld [vmem:[#allocation2 + $0x18] sm:$0xff]
    %v35 = vld [vmem:[%s0] sm:$0xff]
    %v36 = vld [vmem:[%s0 + $0x8] sm:$0xff]
    %v37 = vld [vmem:[%s0 + $0x10] sm:$0xff]
    %v38 = vld [vmem:[%s0 + $0x18] sm:$0xff]
    %v39 = vld [vmem:[%s2] sm:$0xff]
    %v40 = vld [vmem:[%s2 + $0x8] sm:$0xff]
    %v41 = vld [vmem:[%s2 + $0x10] sm:$0xff]
    %v42 = vld [vmem:[%s2 + $0x18] sm:$0xff]
    %44 = vset.pattern.permute.xlu0 0
    %45 = vperm.xlu0 %44, %v39
    %v46 = vpop.permute.xlu0 %45
    %49 = vset.pattern.permute.xlu0 0
    %50 = vperm.xlu0 %49, %v40
    %v51 = vpop.permute.xlu0 %50
    %54 = vset.pattern.permute.xlu0 0
    %55 = vperm.xlu0 %54, %v41
    %v56 = vpop.permute.xlu0 %55
    %59 = vset.pattern.permute.xlu0 0
    %60 = vperm.xlu0 %59, %v42
    %v61 = vpop.permute.xlu0 %60
    %vm63 = vcmask 261120
    %v65 = vsel %vm63, %v31, 0
    %v68 = vsel %vm63, %v32, 0
    %v71 = vsel %vm63, %v33, 0
    %v74 = vsel %vm63, %v34, 0
    %76 = vmatpush.msra.mxu0 0.0
    %77 = vmatpush.msra.mxu0 0.0
    %78 = vmatpush.msra.mxu0 0.0
    %79 = vmatpush.msra.mxu0 0.0
    %80 = vmatpush.msra.mxu0 0.0
    %81 = vmatpush.msra.mxu0 0.0
    %82 = vmatpush.msra.mxu0 0.0
    %83 = vmatpush.msra.mxu0 0.0
    %84 = vmatpush.msra.mxu0 0.0
    %85 = vmatpush.msra.mxu0 0.0
    %86 = vmatpush.msra.mxu0 0.0
    %87 = vmatpush.msra.mxu0 0.0
    %88 = vmatpush.msra.mxu0 %v38
    %89 = vmatpush.msra.mxu0 %v37
    %90 = vmatpush.msra.mxu0 %v36
    %91 = vmatpush.msra.mxu0 %v35
    %92 = vmatmul.f32.gmra.mxu0 %v65
    %v93 = vpop.f32.mrf.mxu0
    %v94 = vadd.f32 %v46, %v93
    %95 = vmatmul.f32.gmra.mxu0 %v68
    %v96 = vpop.f32.mrf.mxu0
    %v97 = vadd.f32 %v51, %v96
    %98 = vmatmul.f32.gmra.mxu0 %v71
    %v99 = vpop.f32.mrf.mxu0
    %v100 = vadd.f32 %v56, %v99
    %101 = vmatmul.f32.gmra.mxu0 %v74
    %v102 = vpop.f32.mrf.mxu0
    %v103 = vadd.f32 %v61, %v102
    %104 = vdwg.mxu0
    %v105 = vmul.f32 %v94, 0.5
    %v106 = vmul.f32 %v97, 0.5
    %v107 = vmul.f32 %v100, 0.5
    %v108 = vmul.f32 %v103, 0.5
    %v109 = vmul.f32 %v94, 0.70710677
    %v110 = vmul.f32 %v97, 0.70710677
    %v111 = vmul.f32 %v100, 0.70710677
    %v112 = vmul.f32 %v103, 0.70710677
    %v113 = vmul.f32 %v109, %v109
    %v114 = vmin.f32 16.0, %v113
    %v115 = vmul.f32 %v114, 2.1237322e-06
    %v116 = vadd.f32 %v115, 0.00028619796
    %v117 = vmul.f32 %v114, %v116
    %v118 = vadd.f32 %v117, 0.0036580483
    %v119 = vmul.f32 %v114, %v118
    %v120 = vadd.f32 %v119, 0.05243302
    %v121 = vmul.f32 %v114, %v120
    %v122 = vadd.f32 %v121, 0.18741608
    %v123 = vmul.f32 %v114, %v122
    %v124 = vadd.f32 %v123, 1.1283791
    %v125 = vmul.f32 %v109, %v124
    %v126 = vmul.f32 %v114, 3.8918573e-05
    %v127 = vadd.f32 %v126, 0.001143296
    %v128 = vmul.f32 %v114, %v127
    %v129 = vadd.f32 %v128, 0.014752088
    %v130 = vmul.f32 %v114, %v129
    %v131 = vadd.f32 %v130, 0.112945676
    %v132 = vmul.f32 %v114, %v131
    %v133 = vadd.f32 %v132, 0.4994258
    %v134 = vmul.f32 %v114, %v133
    %v135 = vadd.f32 %v134, 1.0
    %v136 = vrcp.pop %v135
    %v137 = vmul.f32 %v135, %v136
    %v138 = vsub.f32 1.0, %v137
    %v139 = vmul.f32 %v136, %v138
    %v140 = vadd.f32 %v136, %v139
    %vm141 = vweird.f32 %v135
    %vm142 = vweird.f32 %v136
    %vm143 = vmor %vm141, %vm142
    %v144 = vsel %vm143, %v136, %v140
    %v145 = vand.u32 2147483647, %v135
    %vm146 = vcmp.eq.f32.partialorder %v145, 8.507059e+37
    %v147 = vand.u32 %v135, 2147483648
    %v148 = vor.u32 1.1754944e-38, %v147
    %v149 = vsel %vm146, %v148, %v144
    %v150 = vmul.f32 %v125, %v149
    %v151 = vmin.f32 %v150, 1.0
    %v152 = vmax.f32 %v151, -1.0
    %v153 = vmul.f32 %v110, %v110
    %v154 = vmin.f32 16.0, %v153
    %v155 = vmul.f32 %v154, 2.1237322e-06
    %v156 = vadd.f32 %v155, 0.00028619796
    %v157 = vmul.f32 %v154, %v156
    %v158 = vadd.f32 %v157, 0.0036580483
    %v159 = vmul.f32 %v154, %v158
    %v160 = vadd.f32 %v159, 0.05243302
    %v161 = vmul.f32 %v154, %v160
    %v162 = vadd.f32 %v161, 0.18741608
    %v163 = vmul.f32 %v154, %v162
    %v164 = vadd.f32 %v163, 1.1283791
    %v165 = vmul.f32 %v110, %v164
    %v166 = vmul.f32 %v154, 3.8918573e-05
    %v167 = vadd.f32 %v166, 0.001143296
    %v168 = vmul.f32 %v154, %v167
    %v169 = vadd.f32 %v168, 0.014752088
    %v170 = vmul.f32 %v154, %v169
    %v171 = vadd.f32 %v170, 0.112945676
    %v172 = vmul.f32 %v154, %v171
    %v173 = vadd.f32 %v172, 0.4994258
    %v174 = vmul.f32 %v154, %v173
    %v175 = vadd.f32 %v174, 1.0
    %v176 = vrcp.pop %v175
    %v177 = vmul.f32 %v175, %v176
    %v178 = vsub.f32 1.0, %v177
    %v179 = vmul.f32 %v176, %v178
    %v180 = vadd.f32 %v176, %v179
    %vm181 = vweird.f32 %v175
    %vm182 = vweird.f32 %v176
    %vm183 = vmor %vm181, %vm182
    %v184 = vsel %vm183, %v176, %v180
    %v185 = vand.u32 2147483647, %v175
    %vm186 = vcmp.eq.f32.partialorder %v185, 8.507059e+37
    %v187 = vand.u32 %v175, 2147483648
    %v188 = vor.u32 1.1754944e-38, %v187
    %v189 = vsel %vm186, %v188, %v184
    %v190 = vmul.f32 %v165, %v189
    %v191 = vmin.f32 %v190, 1.0
    %v192 = vmax.f32 %v191, -1.0
    %v193 = vmul.f32 %v111, %v111
    %v194 = vmin.f32 16.0, %v193
    %v195 = vmul.f32 %v194, 2.1237322e-06
    %v196 = vadd.f32 %v195, 0.00028619796
    %v197 = vmul.f32 %v194, %v196
    %v198 = vadd.f32 %v197, 0.0036580483
    %v199 = vmul.f32 %v194, %v198
    %v200 = vadd.f32 %v199, 0.05243302
    %v201 = vmul.f32 %v194, %v200
    %v202 = vadd.f32 %v201, 0.18741608
    %v203 = vmul.f32 %v194, %v202
    %v204 = vadd.f32 %v203, 1.1283791
    %v205 = vmul.f32 %v111, %v204
    %v206 = vmul.f32 %v194, 3.8918573e-05
    %v207 = vadd.f32 %v206, 0.001143296
    %v208 = vmul.f32 %v194, %v207
    %v209 = vadd.f32 %v208, 0.014752088
    %v210 = vmul.f32 %v194, %v209
    %v211 = vadd.f32 %v210, 0.112945676
    %v212 = vmul.f32 %v194, %v211
    %v213 = vadd.f32 %v212, 0.4994258
    %v214 = vmul.f32 %v194, %v213
    %v215 = vadd.f32 %v214, 1.0
    %v216 = vrcp.pop %v215
    %v217 = vmul.f32 %v215, %v216
    %v218 = vsub.f32 1.0, %v217
    %v219 = vmul.f32 %v216, %v218
    %v220 = vadd.f32 %v216, %v219
    %vm221 = vweird.f32 %v215
    %vm222 = vweird.f32 %v216
    %vm223 = vmor %vm221, %vm222
    %v224 = vsel %vm223, %v216, %v220
    %v225 = vand.u32 2147483647, %v215
    %vm226 = vcmp.eq.f32.partialorder %v225, 8.507059e+37
    %v227 = vand.u32 %v215, 2147483648
    %v228 = vor.u32 1.1754944e-38, %v227
    %v229 = vsel %vm226, %v228, %v224
    %v230 = vmul.f32 %v205, %v229
    %v231 = vmin.f32 %v230, 1.0
    %v232 = vmax.f32 %v231, -1.0
    %v233 = vmul.f32 %v112, %v112
    %v234 = vmin.f32 16.0, %v233
    %v235 = vmul.f32 %v234, 2.1237322e-06
    %v236 = vadd.f32 %v235, 0.00028619796
    %v237 = vmul.f32 %v234, %v236
    %v238 = vadd.f32 %v237, 0.0036580483
    %v239 = vmul.f32 %v234, %v238
    %v240 = vadd.f32 %v239, 0.05243302
    %v241 = vmul.f32 %v234, %v240
    %v242 = vadd.f32 %v241, 0.18741608
    %v243 = vmul.f32 %v234, %v242
    %v244 = vadd.f32 %v243, 1.1283791
    %v245 = vmul.f32 %v112, %v244
    %v246 = vmul.f32 %v234, 3.8918573e-05
    %v247 = vadd.f32 %v246, 0.001143296
    %v248 = vmul.f32 %v234, %v247
    %v249 = vadd.f32 %v248, 0.014752088
    %v250 = vmul.f32 %v234, %v249
    %v251 = vadd.f32 %v250, 0.112945676
    %v252 = vmul.f32 %v234, %v251
    %v253 = vadd.f32 %v252, 0.4994258
    %v254 = vmul.f32 %v234, %v253
    %v255 = vadd.f32 %v254, 1.0
    %v256 = vrcp.pop %v255
    %v257 = vmul.f32 %v255, %v256
    %v258 = vsub.f32 1.0, %v257
    %v259 = vmul.f32 %v256, %v258
    %v260 = vadd.f32 %v256, %v259
    %vm261 = vweird.f32 %v255
    %vm262 = vweird.f32 %v256
    %vm263 = vmor %vm261, %vm262
    %v264 = vsel %vm263, %v256, %v260
    %v265 = vand.u32 2147483647, %v255
    %vm266 = vcmp.eq.f32.partialorder %v265, 8.507059e+37
    %v267 = vand.u32 %v255, 2147483648
    %v268 = vor.u32 1.1754944e-38, %v267
    %v269 = vsel %vm266, %v268, %v264
    %v270 = vmul.f32 %v245, %v269
    %v271 = vmin.f32 %v270, 1.0
    %v272 = vmax.f32 %v271, -1.0
    %v273 = vmul.f32 %v105, %v152
    %v274 = vmul.f32 %v106, %v192
    %v275 = vmul.f32 %v107, %v232
    %v276 = vmul.f32 %v108, %v272
    %v277 = vadd.f32 %v273, %v105
    %v278 = vadd.f32 %v274, %v106
    %v279 = vadd.f32 %v275, %v107
    %v280 = vadd.f32 %v276, %v108
    %281 = vst [vmem:[#allocation5] sm:$0xff] %v277
    %282 = vst [vmem:[#allocation5 + $0x8] sm:$0xff] %v278
    %283 = vst [vmem:[#allocation5 + $0x10] sm:$0xff] %v279
    %284 = vst [vmem:[#allocation5 + $0x18] sm:$0xff] %v280
    // Predicated region
    $region18: #{tpu_custom_call.1} parent=1 // pred_check
      _
    $region19: #{tpu_custom_call.1} parent=1 // pred_check_branch
      %286 = sbr.rel (0) target = $region21
    $region20: #{tpu_custom_call.1} parent=1 // pred_region
      %288 = vsyncadd [#allocation4], 0
      %s289 = sshll.u32 [#allocation5], 4
      %s290 = int_to_ptr.vmem [resolvable:$true] %s289
      %s291 = sshll.u32 %s3, 4
      %s292 = int_to_ptr.hbm [resolvable:$true] %s291
      %297 = dma.vmem_to_hbm [thread:$0]  %s290, 512, %s292, [#allocation4], 128, 128, 8
    $region21: #{tpu_custom_call.1} parent=1 // pred_fallthru
      _
    // Predicated region
    $region22: #{tpu_custom_call.1} parent=1 // pred_check
      _
    $region23: #{tpu_custom_call.1} parent=1 // pred_check_branch
      %299 = sbr.rel (0) target = $region25
    $region24: #{tpu_custom_call.1} parent=1 // pred_region
      %301 = dma.done [#allocation4], 512
    $region25: #{tpu_custom_call.1} parent=1 // pred_fallthru
      _
    %302 = vsyncpa [#allocation3], 1
    %303 = vsyncpa [#allocation4], 1

</llo_original>
